<compile_context>
chip_gen: v7x
topology: tpu7x:2x2x1
jax: 0.10.0
libtpu: 0.0.40
codegen_flags: <defaults>
</compile_context>

<pallas_src>
import functools
import math

import jax
import jax.numpy as jnp
import numpy as np
from jax.experimental import pallas as pl
from jax.experimental.pallas import tpu as pltpu


def _round_up(x, m):
    return (x + m - 1) // m * m


# ------------------------------ Pallas kernel -------------------------------
def _global_agg_kernel(nbr_ref, wgt_ref, ext_ref, self_ref,
                       w1t_ref, w1b_ref, w2_ref, w3s_ref, w3n_ref,
                       out_ref, *, s_valid):
    """One row-tile.
    nbr:(tm,Sk,D)  wgt:(tm,Sk)  ext/self:(tm,D)   (all at caller dtype, f32)
    w1t:(D,D) bf16 (= w_1[:D])   w1b:(1,D) f32 (= w_1[D])   w2:(1,D) f32
    w3s/w3n:(D,D) bf16 (= w_3[:D] / w_3[D:])      out:(tm,D) f32
    Sk % 8 == 0 (wrapper-guaranteed) so every reshape below is layout-free."""
    tm, sk, d = nbr_ref.shape
    nbr = nbr_ref[...].astype(jnp.bfloat16)      # cast in VMEM, not in HBM
    ext = ext_ref[...].astype(jnp.bfloat16)
    wgt = wgt_ref[...].astype(jnp.float32)       # (tm, Sk)
    w1b = w1b_ref[0]                             # (D,) f32
    w2 = w2_ref[0]                               # (D,) f32

    # cat([extra*nbr, weight], -1) @ w_1 == (extra*nbr) @ w_1[:D] + weight*w_1[D]
    # Single big 2-D MXU dot; the reshape is layout-free because Sk % 8 == 0.
    prod = (ext[:, None, :] * nbr).reshape(tm * sk, d)                 # bf16
    a = jnp.dot(prod, w1t_ref[...], preferred_element_type=jnp.float32)
    a = a.reshape(tm, sk, d) + wgt[:, :, None] * w1b[None, None, :]
    # fused LeakyReLU(0.2) + w_2 reduction -> attention logits
    e = jnp.sum(jnp.where(a >= 0, a, 0.2 * a) * w2[None, None, :],
                axis=-1)                                               # (tm,Sk) f32

    # softmax over samples; mask only emitted when the sample axis was padded.
    if s_valid < sk:
        col = jax.lax.broadcasted_iota(jnp.int32, (tm, sk), 1)
        e = jnp.where(col < s_valid, e, -1e30)
    e_max = jnp.max(e, axis=-1, keepdims=True)
    p = jnp.exp(e - e_max)
    alpha = p * pl.reciprocal(jnp.sum(p, axis=-1, keepdims=True), approx=True)

    # weighted neighbor sum: multiply in bf16 (no f32 copy of nbr), reduce in f32
    agg = jnp.sum((alpha.astype(jnp.bfloat16)[:, :, None] * nbr)
                  .astype(jnp.float32), axis=1)                        # (tm, D)

    # cat([self, agg], -1) @ w_3 == self @ w_3[:D] + agg @ w_3[D:]
    out = jnp.dot(self_ref[...].astype(jnp.bfloat16), w3s_ref[...],
                  preferred_element_type=jnp.float32)
    out = out + jnp.dot(agg.astype(jnp.bfloat16), w3n_ref[...],
                        preferred_element_type=jnp.float32)
    out_ref[...] = jnp.maximum(out, 0.0).astype(out_ref.dtype)        # act = relu


# --------------------------------- wrapper ----------------------------------
def global_aggregator_forward(params, self_vectors, neighbor_vector, batch_size,
                              masks, neighbor_weight=None, extra_vector=None,
                              *, tile_rows=512):
    """Matches GlobalAggregator.forward (eval mode, act=relu). `masks` is unused,
    exactly like the PyTorch reference."""
    del masks
    w1, w2, w3 = params['w_1'], params['w_2'], params['w_3']
    B, M, S, D = neighbor_vector.shape
    R = B * M

    nbr = neighbor_vector.reshape(R, S, D)        # contiguous -> free reshape
    sv = self_vectors.reshape(R, D)
    if extra_vector is None:
        # extra_vector=None branch of the reference is a plain mean over the
        # neighbors; zero extra & zero weight give exactly uniform attention.
        ext = jnp.zeros((R, D), nbr.dtype)
        wgt = jnp.zeros((R, S), jnp.float32)
    else:
        ext = extra_vector.reshape(R, D)
        wgt = neighbor_weight.reshape(R, S).astype(jnp.float32)

    # Sample axis must be a multiple of 8 so the in-kernel (tm*S, D) reshape is
    # layout-free.  Only pad when needed (no HBM copy for the usual S % 8 == 0).
    Sk = _round_up(S, 8)
    if Sk != S:
        nbr = jnp.pad(nbr, ((0, 0), (0, Sk - S), (0, 0)))
        wgt = jnp.pad(wgt, ((0, 0), (0, Sk - S)))

    # Row-tile size: budget the double-buffered neighbor stream against VMEM
    # (safe on v7x's 64 MiB) and keep >= 2 grid steps so v7x can use both TCs.
    itemsize = np.dtype(nbr.dtype).itemsize
    row_vmem = Sk * _round_up(D, 128) * itemsize          # per-row nbr VMEM bytes
    tm_cap = max(8, ((16 * 1024 * 1024) // (2 * row_vmem)) // 8 * 8)
    tm = min(int(tile_rows), tm_cap, _round_up(R, 8))
    tm = min(tm, max(8, _round_up(pl.cdiv(R, 2), 8)))
    if R % tm != 0:                    # prefer a divisor of R over row padding
        for cand in range(tm, 7, -8):
            if R % cand == 0:
                tm = cand
                break
    Rp = _round_up(R, tm)
    if Rp != R:                        # rare: no multiple-of-8 divisor of R
        nbr = jnp.pad(nbr, ((0, Rp - R), (0, 0), (0, 0)))
        wgt = jnp.pad(wgt, ((0, Rp - R), (0, 0)))
        ext = jnp.pad(ext, ((0, Rp - R), (0, 0)))
        sv = jnp.pad(sv, ((0, Rp - R), (0, 0)))

    w1t = w1[:D].astype(jnp.bfloat16)                 # (D, D)
    w1b = w1[D:D + 1].astype(jnp.float32)             # (1, D)
    w2r = w2.reshape(1, D).astype(jnp.float32)        # (1, D)
    w3s = w3[:D].astype(jnp.bfloat16)                 # (D, D)
    w3n = w3[D:].astype(jnp.bfloat16)                 # (D, D)

    out = pl.pallas_call(
        functools.partial(_global_agg_kernel, s_valid=S),
        out_shape=jax.ShapeDtypeStruct((Rp, D), jnp.float32),
        grid=(Rp // tm,),
        in_specs=[
            pl.BlockSpec((tm, Sk, D), lambda r: (r, 0, 0)),   # neighbors (dominant)
            pl.BlockSpec((tm, Sk), lambda r: (r, 0)),         # neighbor weight
            pl.BlockSpec((tm, D), lambda r: (r, 0)),          # extra (session) vec
            pl.BlockSpec((tm, D), lambda r: (r, 0)),          # self vectors
            pl.BlockSpec((D, D), lambda r: (0, 0)),           # w_1[:D]
            pl.BlockSpec((1, D), lambda r: (0, 0)),           # w_1[D]
            pl.BlockSpec((1, D), lambda r: (0, 0)),           # w_2
            pl.BlockSpec((D, D), lambda r: (0, 0)),           # w_3[:D]
            pl.BlockSpec((D, D), lambda r: (0, 0)),           # w_3[D:]
        ],
        out_specs=pl.BlockSpec((tm, D), lambda r: (r, 0)),
        compiler_params=pltpu.CompilerParams(
            dimension_semantics=("parallel",),
            vmem_limit_bytes=48 * 1024 * 1024),
    )(nbr, wgt, ext, sv, w1t, w1b, w2r, w3s, w3n)

    # TODO(synk): F.dropout before w_3 is stochastic; identity here (eval mode).
    return out[:R].reshape(batch_size, -1, D)


# ------------------------------ pure-JAX reference ---------------------------
def global_aggregator_reference(params, self_vectors, neighbor_vector, batch_size,
                                masks, neighbor_weight=None, extra_vector=None):
    del masks
    w1, w2, w3 = params['w_1'], params['w_2'], params['w_3']
    D = w2.shape[0]
    if extra_vector is not None:
        S = neighbor_vector.shape[2]
        ext = jnp.repeat(extra_vector[:, :, None, :], S, axis=2)
        alpha = jnp.matmul(jnp.concatenate(
            [ext * neighbor_vector, neighbor_weight[..., None]], -1), w1)
        alpha = jnp.where(alpha >= 0, alpha, 0.2 * alpha)
        alpha = jnp.matmul(alpha, w2)[..., 0]
        alpha = jax.nn.softmax(alpha, -1)[..., None]
        nbr = jnp.sum(alpha * neighbor_vector, axis=-2)
    else:
        nbr = jnp.mean(neighbor_vector, axis=2)
    out = jnp.matmul(jnp.concatenate([self_vectors, nbr], -1), w3)
    return jnp.maximum(out.reshape(batch_size, -1, D), 0.0)


# --------------------------------- parameters --------------------------------
def init_params(key, dim):
    stdv = 1.0 / math.sqrt(dim)
    k1, k2, k3, k4 = jax.random.split(key, 4)
    u = lambda k, s: jax.random.uniform(k, s, jnp.float32, -stdv, stdv)
    return {
        'w_1': u(k1, (dim + 1, dim)),
        'w_2': u(k2, (dim, 1)),
        'w_3': u(k3, (2 * dim, dim)),
        'bias': u(k4, (dim,)),   # present in the module but unused in forward()
    }


# ------------------------------------ main ------------------------------------
if __name__ == "__main__":
    B, M, S, D = 2, 8, 8, 32     # batch, seq, sample_num, hidden dim

    key = jax.random.PRNGKey(0)
    k_par, k_self, k_nbr, k_wgt, k_ext = jax.random.split(key, 5)

    params = init_params(k_par, D)
    self_vectors = jax.random.normal(k_self, (B, M, D), jnp.float32)
    neighbor_vector = jax.random.normal(k_nbr, (B, M, S, D), jnp.float32)
    neighbor_weight = jax.random.uniform(k_wgt, (B, M, S), jnp.float32)
    extra_vector = jax.random.normal(k_ext, (B, M, D), jnp.float32)
    masks = jnp.ones((B, M), jnp.float32)    # unused by the reference forward

    # 1) attention branch, S % 8 == 0 (no padding anywhere, fast path)
    fwd = jax.jit(lambda p, sv, nb, nw, ev: global_aggregator_forward(
        p, sv, nb, B, masks, nw, ev))
    out = fwd(params, self_vectors, neighbor_vector, neighbor_weight, extra_vector)
    jax.block_until_ready(out)
    assert out.shape == (B, M, D), out.shape
    ref = global_aggregator_reference(params, self_vectors, neighbor_vector, B,
                                      masks, neighbor_weight, extra_vector)
    np.testing.assert_allclose(np.asarray(out), np.asarray(ref),
                               rtol=5e-2, atol=5e-2)

    # 2) S % 8 != 0 exercises the sample-padding + masked-softmax path
    S2 = 6
    nbr2 = neighbor_vector[:, :, :S2]
    wgt2 = neighbor_weight[:, :, :S2]
    fwd2 = jax.jit(lambda p, sv, nb, nw, ev: global_aggregator_forward(
        p, sv, nb, B, masks, nw, ev))
    out2 = fwd2(params, self_vectors, nbr2, wgt2, extra_vector)
    jax.block_until_ready(out2)
    ref2 = global_aggregator_reference(params, self_vectors, nbr2, B, masks,
                                       wgt2, extra_vector)
    np.testing.assert_allclose(np.asarray(out2), np.asarray(ref2),
                               rtol=5e-2, atol=5e-2)

    # 3) extra_vector=None branch (plain mean over neighbors)
    fwd_mean = jax.jit(lambda p, sv, nb: global_aggregator_forward(
        p, sv, nb, B, masks, None, None))
    out_mean = fwd_mean(params, self_vectors, neighbor_vector)
    jax.block_until_ready(out_mean)
    ref_mean = global_aggregator_reference(params, self_vectors, neighbor_vector,
                                           B, masks, None, None)
    np.testing.assert_allclose(np.asarray(out_mean), np.asarray(ref_mean),
                               rtol=5e-2, atol=5e-2)

    print("KERNEL_OK")
</pallas_src>

<mosaic_0001>
module attributes {stable_mosaic.version = 11 : i64} {
  func.func @_global_agg_kernel(%arg0: i32, %arg1: memref<8x8x32xf32, #tpu.memory_space<vmem>>, %arg2: memref<8x8xf32, #tpu.memory_space<vmem>>, %arg3: memref<8x32xf32, #tpu.memory_space<vmem>>, %arg4: memref<8x32xf32, #tpu.memory_space<vmem>>, %arg5: memref<32x32xbf16, #tpu.memory_space<vmem>>, %arg6: memref<1x32xf32, #tpu.memory_space<vmem>>, %arg7: memref<1x32xf32, #tpu.memory_space<vmem>>, %arg8: memref<32x32xbf16, #tpu.memory_space<vmem>>, %arg9: memref<32x32xbf16, #tpu.memory_space<vmem>>, %arg10: memref<8x32xf32, #tpu.memory_space<vmem>>) attributes {dimension_semantics = [#tpu.dimension_semantics<parallel>], iteration_bounds = array<i64: 2>, scalar_prefetch = 0 : i64, scratch_operands = 0 : i64, tpu.core_type = #tpu.core_type<tc>, window_params = [{transform_indices = @transform_0, window_bounds = array<i64: 8, 8, 32>}, {transform_indices = @transform_1, window_bounds = array<i64: 8, 8>}, {transform_indices = @transform_2, window_bounds = array<i64: 8, 32>}, {transform_indices = @transform_3, window_bounds = array<i64: 8, 32>}, {pipeline_mode = #tpu.pipeline_mode<synchronous>, transform_indices = @transform_4, window_bounds = array<i64: 32, 32>}, {pipeline_mode = #tpu.pipeline_mode<synchronous>, transform_indices = @transform_5, window_bounds = array<i64: 1, 32>}, {pipeline_mode = #tpu.pipeline_mode<synchronous>, transform_indices = @transform_6, window_bounds = array<i64: 1, 32>}, {pipeline_mode = #tpu.pipeline_mode<synchronous>, transform_indices = @transform_7, window_bounds = array<i64: 32, 32>}, {pipeline_mode = #tpu.pipeline_mode<synchronous>, transform_indices = @transform_8, window_bounds = array<i64: 32, 32>}, {transform_indices = @transform_9, window_bounds = array<i64: 8, 32>}]} {
    %c0 = arith.constant 0 : index
    %c0_0 = arith.constant 0 : index
    %c0_1 = arith.constant 0 : index
    %0 = vector.load %arg1[%c0, %c0_0, %c0_1] : memref<8x8x32xf32, #tpu.memory_space<vmem>>, vector<8x8x32xf32>
    %1 = arith.truncf %0 : vector<8x8x32xf32> to vector<8x8x32xbf16>
    %c0_2 = arith.constant 0 : index
    %c0_3 = arith.constant 0 : index
    %2 = vector.load %arg3[%c0_2, %c0_3] : memref<8x32xf32, #tpu.memory_space<vmem>>, vector<8x32xf32>
    %3 = arith.truncf %2 : vector<8x32xf32> to vector<8x32xbf16>
    %c0_4 = arith.constant 0 : index
    %c0_5 = arith.constant 0 : index
    %4 = vector.load %arg2[%c0_4, %c0_5] : memref<8x8xf32, #tpu.memory_space<vmem>>, vector<8x8xf32>
    %c0_6 = arith.constant 0 : index
    %c0_7 = arith.constant 0 : index
    %5 = vector.load %arg6[%c0_6, %c0_7] : memref<1x32xf32, #tpu.memory_space<vmem>>, vector<1x32xf32>
    %6 = vector.shape_cast %5 : vector<1x32xf32> to vector<32xf32>
    %c0_8 = arith.constant 0 : index
    %c0_9 = arith.constant 0 : index
    %7 = vector.load %arg7[%c0_8, %c0_9] : memref<1x32xf32, #tpu.memory_space<vmem>>, vector<1x32xf32>
    %8 = vector.shape_cast %7 : vector<1x32xf32> to vector<32xf32>
    %9 = vector.shape_cast %3 : vector<8x32xbf16> to vector<8x1x32xbf16>
    %10 = vector.broadcast %9 : vector<8x1x32xbf16> to vector<8x8x32xbf16>
    %11 = arith.mulf %10, %1 : vector<8x8x32xbf16>
    %12 = vector.shape_cast %11 : vector<8x8x32xbf16> to vector<64x32xbf16>
    %c0_10 = arith.constant 0 : index
    %c0_11 = arith.constant 0 : index
    %13 = vector.load %arg5[%c0_10, %c0_11] : memref<32x32xbf16, #tpu.memory_space<vmem>>, vector<32x32xbf16>
    %cst = arith.constant dense<0.000000e+00> : vector<64x32xf32>
    %14 = tpu.matmul %12, %13, %cst {dimension_numbers = #tpu.dot_dimension_numbers<[1], [0], [0], [1], [0, 0, 1, 1], [], []>} : vector<64x32xbf16>, vector<32x32xbf16>, vector<64x32xf32> -> vector<64x32xf32>
    %15 = vector.shape_cast %14 : vector<64x32xf32> to vector<8x8x32xf32>
    %16 = vector.shape_cast %4 : vector<8x8xf32> to vector<8x8x1xf32>
    %17 = vector.shape_cast %6 : vector<32xf32> to vector<1x1x32xf32>
    %18 = vector.broadcast %16 : vector<8x8x1xf32> to vector<8x8x32xf32>
    %19 = vector.broadcast %17 : vector<1x1x32xf32> to vector<8x8x32xf32>
    %20 = arith.mulf %18, %19 : vector<8x8x32xf32>
    %21 = arith.addf %15, %20 : vector<8x8x32xf32>
    %cst_12 = arith.constant 0.000000e+00 : f32
    %22 = vector.broadcast %cst_12 : f32 to vector<8x8x32xf32>
    %23 = arith.cmpf oge, %21, %22 : vector<8x8x32xf32>
    %cst_13 = arith.constant 2.000000e-01 : f32
    %24 = vector.broadcast %cst_13 : f32 to vector<8x8x32xf32>
    %25 = arith.mulf %24, %21 : vector<8x8x32xf32>
    %26 = arith.select %23, %21, %25 : vector<8x8x32xi1>, vector<8x8x32xf32>
    %27 = vector.shape_cast %8 : vector<32xf32> to vector<1x1x32xf32>
    %28 = vector.broadcast %27 : vector<1x1x32xf32> to vector<8x8x32xf32>
    %29 = arith.mulf %26, %28 : vector<8x8x32xf32>
    %cst_14 = arith.constant dense<0.000000e+00> : vector<8x8xf32>
    %30 = vector.multi_reduction <add>, %29, %cst_14 [2] : vector<8x8x32xf32> to vector<8x8xf32>
    %cst_15 = arith.constant dense<0xFF800000> : vector<8xf32>
    %31 = vector.multi_reduction <maximumf>, %30, %cst_15 [1] : vector<8x8xf32> to vector<8xf32>
    %32 = vector.shape_cast %31 : vector<8xf32> to vector<8x1xf32>
    %33 = vector.broadcast %32 : vector<8x1xf32> to vector<8x8xf32>
    %34 = arith.subf %30, %33 : vector<8x8xf32>
    %35 = math.exp %34 : vector<8x8xf32>
    %cst_16 = arith.constant dense<0.000000e+00> : vector<8xf32>
    %36 = vector.multi_reduction <add>, %35, %cst_16 [1] : vector<8x8xf32> to vector<8xf32>
    %37 = vector.shape_cast %36 : vector<8xf32> to vector<8x1xf32>
    %38 = tpu.reciprocal %37 {approx = true} : vector<8x1xf32> -> vector<8x1xf32>
    %39 = vector.broadcast %38 : vector<8x1xf32> to vector<8x8xf32>
    %40 = arith.mulf %35, %39 : vector<8x8xf32>
    %41 = arith.truncf %40 : vector<8x8xf32> to vector<8x8xbf16>
    %42 = vector.shape_cast %41 : vector<8x8xbf16> to vector<8x8x1xbf16>
    %43 = vector.broadcast %42 : vector<8x8x1xbf16> to vector<8x8x32xbf16>
    %44 = arith.mulf %43, %1 : vector<8x8x32xbf16>
    %45 = arith.extf %44 : vector<8x8x32xbf16> to vector<8x8x32xf32>
    %cst_17 = arith.constant dense<0.000000e+00> : vector<8x32xf32>
    %46 = vector.multi_reduction <add>, %45, %cst_17 [1] : vector<8x8x32xf32> to vector<8x32xf32>
    %c0_18 = arith.constant 0 : index
    %c0_19 = arith.constant 0 : index
    %47 = vector.load %arg4[%c0_18, %c0_19] : memref<8x32xf32, #tpu.memory_space<vmem>>, vector<8x32xf32>
    %48 = arith.truncf %47 : vector<8x32xf32> to vector<8x32xbf16>
    %c0_20 = arith.constant 0 : index
    %c0_21 = arith.constant 0 : index
    %49 = vector.load %arg8[%c0_20, %c0_21] : memref<32x32xbf16, #tpu.memory_space<vmem>>, vector<32x32xbf16>
    %cst_22 = arith.constant dense<0.000000e+00> : vector<8x32xf32>
    %50 = tpu.matmul %48, %49, %cst_22 {dimension_numbers = #tpu.dot_dimension_numbers<[1], [0], [0], [1], [0, 0, 1, 1], [], []>} : vector<8x32xbf16>, vector<32x32xbf16>, vector<8x32xf32> -> vector<8x32xf32>
    %51 = arith.truncf %46 : vector<8x32xf32> to vector<8x32xbf16>
    %c0_23 = arith.constant 0 : index
    %c0_24 = arith.constant 0 : index
    %52 = vector.load %arg9[%c0_23, %c0_24] : memref<32x32xbf16, #tpu.memory_space<vmem>>, vector<32x32xbf16>
    %cst_25 = arith.constant dense<0.000000e+00> : vector<8x32xf32>
    %53 = tpu.matmul %51, %52, %cst_25 {dimension_numbers = #tpu.dot_dimension_numbers<[1], [0], [0], [1], [0, 0, 1, 1], [], []>} : vector<8x32xbf16>, vector<32x32xbf16>, vector<8x32xf32> -> vector<8x32xf32>
    %54 = arith.addf %50, %53 : vector<8x32xf32>
    %cst_26 = arith.constant 0.000000e+00 : f32
    %55 = vector.broadcast %cst_26 : f32 to vector<8x32xf32>
    %56 = arith.maximumf %54, %55 : vector<8x32xf32>
    %c0_27 = arith.constant 0 : index
    %c0_28 = arith.constant 0 : index
    %57 = vector.load %arg10[%c0_27, %c0_28] : memref<8x32xf32, #tpu.memory_space<vmem>>, vector<8x32xf32>
    tpu.vector_store %arg10[%c0_27, %c0_28], %56 {strides = array<i32>} : memref<8x32xf32, #tpu.memory_space<vmem>>, vector<8x32xf32>,
    return
  }
  func.func @transform_0(%arg0: i32) -> (i32, i32, i32) {
    %c0_i32 = arith.constant 0 : i32
    %c0_i32_0 = arith.constant 0 : i32
    %c0_i32_1 = arith.constant 0 : i32
    return %arg0, %c0_i32, %c0_i32_0 : i32, i32, i32
  }
  func.func @transform_1(%arg0: i32) -> (i32, i32) {
    %c0_i32 = arith.constant 0 : i32
    %c0_i32_0 = arith.constant 0 : i32
    return %arg0, %c0_i32 : i32, i32
  }
  func.func @transform_2(%arg0: i32) -> (i32, i32) {
    %c0_i32 = arith.constant 0 : i32
    %c0_i32_0 = arith.constant 0 : i32
    return %arg0, %c0_i32 : i32, i32
  }
  func.func @transform_3(%arg0: i32) -> (i32, i32) {
    %c0_i32 = arith.constant 0 : i32
    %c0_i32_0 = arith.constant 0 : i32
    return %arg0, %c0_i32 : i32, i32
  }
  func.func @transform_4(%arg0: i32) -> (i32, i32) {
    %c0_i32 = arith.constant 0 : i32
    %c0_i32_0 = arith.constant 0 : i32
    %c0_i32_1 = arith.constant 0 : i32
    return %c0_i32, %c0_i32_0 : i32, i32
  }
  func.func @transform_5(%arg0: i32) -> (i32, i32) {
    %c0_i32 = arith.constant 0 : i32
    %c0_i32_0 = arith.constant 0 : i32
    %c0_i32_1 = arith.constant 0 : i32
    return %c0_i32, %c0_i32_0 : i32, i32
  }
  func.func @transform_6(%arg0: i32) -> (i32, i32) {
    %c0_i32 = arith.constant 0 : i32
    %c0_i32_0 = arith.constant 0 : i32
    %c0_i32_1 = arith.constant 0 : i32
    return %c0_i32, %c0_i32_0 : i32, i32
  }
  func.func @transform_7(%arg0: i32) -> (i32, i32) {
    %c0_i32 = arith.constant 0 : i32
    %c0_i32_0 = arith.constant 0 : i32
    %c0_i32_1 = arith.constant 0 : i32
    return %c0_i32, %c0_i32_0 : i32, i32
  }
  func.func @transform_8(%arg0: i32) -> (i32, i32) {
    %c0_i32 = arith.constant 0 : i32
    %c0_i32_0 = arith.constant 0 : i32
    %c0_i32_1 = arith.constant 0 : i32
    return %c0_i32, %c0_i32_0 : i32, i32
  }
  func.func @transform_9(%arg0: i32) -> (i32, i32) {
    %c0_i32 = arith.constant 0 : i32
    %c0_i32_0 = arith.constant 0 : i32
    return %arg0, %c0_i32 : i32, i32
  }
}

</mosaic_0001>

<llo_original>
// kernel: _lambda_.1
$region0: #{_lambda_.1}
  #allocation0 [shape = 'u32[]', space=smem, size = 0x4, offset = 0x4, fixed_abs, tag = 'smem constant byte address 0x4 - core index']
  #allocation1 [shape = 'u32[144,128]{1,0:T(1,128)}', space=vmem, size = 0x12000, scoped, tag = 'internal scratch']
  %s0 = inlined_call_operand.vmem [shape: f32[16,8,32], index: 0, kind: input, shape index: {}]
  %s1 = inlined_call_operand.vmem [shape: f32[16,8], index: 1, kind: input, shape index: {}]
  %s2 = inlined_call_operand.vmem [shape: f32[16,32], index: 2, kind: input, shape index: {}]
  %s3 = inlined_call_operand.vmem [shape: f32[16,32], index: 3, kind: input, shape index: {}]
  %s4 = inlined_call_operand.vmem [shape: bf16[32,32], index: 4, kind: input, shape index: {}]
  %s5 = inlined_call_operand.vmem [shape: f32[1,32], index: 5, kind: input, shape index: {}]
  %s6 = inlined_call_operand.vmem [shape: f32[1,32], index: 6, kind: input, shape index: {}]
  %s7 = inlined_call_operand.vmem [shape: bf16[32,32], index: 7, kind: input, shape index: {}]
  %s8 = inlined_call_operand.vmem [shape: bf16[32,32], index: 8, kind: input, shape index: {}]
  %s9 = inlined_call_operand.hbm [shape: f32[16,32], index: 9, kind: output, shape index: {}]
  %s10 = sld [smem:[#allocation0]]
  $region69: #{_lambda_.1} parent=0
    _
  %s12 = ssub.s32 1, %s10
  %s13 = scalar_select 0, %s12, %s10
  $region1: #{_lambda_.1} parent=0
    #allocation2 [shape = 'u8[8192]{0}', space=vmem, size = 0x2000, scoped, tag = 'output window, operand 0']
    #allocation3 [shape = 's32[2]{0}', space=sflag, size = 0x8, scoped, tag = 'scoped memory for _lambda_.1']
    %14 = vsyncpa [#allocation3], 0
    %s15 = scalar_lea.sflag [#allocation3], 1
    %16 = vsyncpa %s15, 0
    loop: start=0, step=1, limit=4
    $region2: #{_lambda_.1} parent=1 // loop_pre_header
      _
    $region3: #{_lambda_.1} parent=1 // loop_header
      %s18 = sphi 0, %s22
      %p19 = scmp.ge.s32.totalorder %s18, 4
      %s28 = sphi 0, %s30
      %s31 = sphi 0, %s28
      %s32 = sphi 0, %s31
      %s48 = sphi 0, %s32
      %s54 = sphi 0, %s56
      %s57 = sphi 0, %s54
      %s58 = sphi 0, %s57
      %s74 = sphi 0, %s58
      %s80 = sphi 0, %s82
      %s83 = sphi 0, %s80
      %s84 = sphi 0, %s83
      %s100 = sphi 0, %s84
      %s106 = sphi 0, %s108
      %s109 = sphi 0, %s106
      %s110 = sphi 0, %s109
      %s126 = sphi 0, %s110
      %s130 = sphi 0, %s130
      %s132 = sphi 0, %s130
      %s133 = sphi 0, %s132
      %s147 = sphi 0, %s133
      %s151 = sphi 0, %s151
      %s153 = sphi 0, %s151
      %s154 = sphi 0, %s153
      %s168 = sphi 0, %s154
      %s172 = sphi 0, %s172
      %s174 = sphi 0, %s172
      %s175 = sphi 0, %s174
      %s189 = sphi 0, %s175
      %s193 = sphi 0, %s193
      %s195 = sphi 0, %s193
      %s196 = sphi 0, %s195
      %s210 = sphi 0, %s196
      %s214 = sphi 0, %s214
      %s216 = sphi 0, %s214
      %s217 = sphi 0, %s216
      %s231 = sphi 0, %s217
      %s237 = sphi 0, %s239
      %s240 = sphi 0, %s237
      %s241 = sphi 0, %s240
      %s257 = sphi 0, %s241
    $region4: #{_lambda_.1} parent=1 // loop_header_branch
      %21 = sbr.rel (%p19) target = $region8
    $region5: #{_lambda_.1} parent=1 // loop_body
      %s23 = ssub.s32 %s18, 1
      %s24 = ssub.s32 %s18, 2
      %s25 = sadd.s32 %s18, 1
      %s26 = ssub.s32 %s18, %s25
      %p27 = scmp.eq.s32.totalorder %s26, 0
      %s29 = sadd.s32 %s28, 1
      %s30 = scalar_select %p27, %s28, %s29
      %p33 = pneg %p27
      %p34 = scmp.eq.s32.totalorder %s18, 1
      %p35 = por %p33, %p34
      %p36 = scmp.ne.s32.totalorder %s28, %s31
      %p37 = scmp.eq.s32.totalorder %s18, 0
      %p38 = por %p36, %p37
      %p39 = scmp.ne.s32.totalorder %s28, %s31
      %p40 = scmp.eq.s32.totalorder %s23, 1
      %p41 = por %p39, %p40
      %p42 = scmp.ne.s32.totalorder %s31, %s32
      %p43 = scmp.eq.s32.totalorder %s23, 0
      %p44 = por %p42, %p43
      %p45 = scmp.ne.s32.totalorder %s31, %s32
      %p46 = scmp.eq.s32.totalorder %s24, 1
      %p47 = por %p45, %p46
      %p49 = scmp.ne.s32.totalorder %s32, %s48
      %p50 = scmp.eq.s32.totalorder %s24, 0
      %p51 = por %p49, %p50
      %s52 = ssub.s32 %s18, %s25
      %p53 = scmp.eq.s32.totalorder %s52, 0
      %s55 = sadd.s32 %s54, 1
      %s56 = scalar_select %p53, %s54, %s55
      %p59 = pneg %p53
      %p60 = scmp.eq.s32.totalorder %s18, 1
      %p61 = por %p59, %p60
      %p62 = scmp.ne.s32.totalorder %s54, %s57
      %p63 = scmp.eq.s32.totalorder %s18, 0
      %p64 = por %p62, %p63
      %p65 = scmp.ne.s32.totalorder %s54, %s57
      %p66 = scmp.eq.s32.totalorder %s23, 1
      %p67 = por %p65, %p66
      %p68 = scmp.ne.s32.totalorder %s57, %s58
      %p69 = scmp.eq.s32.totalorder %s23, 0
      %p70 = por %p68, %p69
      %p71 = scmp.ne.s32.totalorder %s57, %s58
      %p72 = scmp.eq.s32.totalorder %s24, 1
      %p73 = por %p71, %p72
      %p75 = scmp.ne.s32.totalorder %s58, %s74
      %p76 = scmp.eq.s32.totalorder %s24, 0
      %p77 = por %p75, %p76
      %s78 = ssub.s32 %s18, %s25
      %p79 = scmp.eq.s32.totalorder %s78, 0
      %s81 = sadd.s32 %s80, 1
      %s82 = scalar_select %p79, %s80, %s81
      %p85 = pneg %p79
      %p86 = scmp.eq.s32.totalorder %s18, 1
      %p87 = por %p85, %p86
      %p88 = scmp.ne.s32.totalorder %s80, %s83
      %p89 = scmp.eq.s32.totalorder %s18, 0
      %p90 = por %p88, %p89
      %p91 = scmp.ne.s32.totalorder %s80, %s83
      %p92 = scmp.eq.s32.totalorder %s23, 1
      %p93 = por %p91, %p92
      %p94 = scmp.ne.s32.totalorder %s83, %s84
      %p95 = scmp.eq.s32.totalorder %s23, 0
      %p96 = por %p94, %p95
      %p97 = scmp.ne.s32.totalorder %s83, %s84
      %p98 = scmp.eq.s32.totalorder %s24, 1
      %p99 = por %p97, %p98
      %p101 = scmp.ne.s32.totalorder %s84, %s100
      %p102 = scmp.eq.s32.totalorder %s24, 0
      %p103 = por %p101, %p102
      %s104 = ssub.s32 %s18, %s25
      %p105 = scmp.eq.s32.totalorder %s104, 0
      %s107 = sadd.s32 %s106, 1
      %s108 = scalar_select %p105, %s106, %s107
      %p111 = pneg %p105
      %p112 = scmp.eq.s32.totalorder %s18, 1
      %p113 = por %p111, %p112
      %p114 = scmp.ne.s32.totalorder %s106, %s109
      %p115 = scmp.eq.s32.totalorder %s18, 0
      %p116 = por %p114, %p115
      %p117 = scmp.ne.s32.totalorder %s106, %s109
      %p118 = scmp.eq.s32.totalorder %s23, 1
      %p119 = por %p117, %p118
      %p120 = scmp.ne.s32.totalorder %s109, %s110
      %p121 = scmp.eq.s32.totalorder %s23, 0
      %p122 = por %p120, %p121
      %p123 = scmp.ne.s32.totalorder %s109, %s110
      %p124 = scmp.eq.s32.totalorder %s24, 1
      %p125 = por %p123, %p124
      %p127 = scmp.ne.s32.totalorder %s110, %s126
      %p128 = scmp.eq.s32.totalorder %s24, 0
      %p129 = por %p127, %p128
      %s131 = sadd.s32 %s130, 1
      %p134 = scmp.eq.s32.totalorder %s18, 1
      %p135 = scmp.ne.s32.totalorder %s130, %s132
      %p136 = scmp.eq.s32.totalorder %s18, 0
      %p137 = por %p135, %p136
      %p138 = scmp.ne.s32.totalorder %s130, %s132
      %p139 = scmp.eq.s32.totalorder %s23, 1
      %p140 = por %p138, %p139
      %p141 = scmp.ne.s32.totalorder %s132, %s133
      %p142 = scmp.eq.s32.totalorder %s23, 0
      %p143 = por %p141, %p142
      %p144 = scmp.ne.s32.totalorder %s132, %s133
      %p145 = scmp.eq.s32.totalorder %s24, 1
      %p146 = por %p144, %p145
      %p148 = scmp.ne.s32.totalorder %s133, %s147
      %p149 = scmp.eq.s32.totalorder %s24, 0
      %p150 = por %p148, %p149
      %s152 = sadd.s32 %s151, 1
      %p155 = scmp.eq.s32.totalorder %s18, 1
      %p156 = scmp.ne.s32.totalorder %s151, %s153
      %p157 = scmp.eq.s32.totalorder %s18, 0
      %p158 = por %p156, %p157
      %p159 = scmp.ne.s32.totalorder %s151, %s153
      %p160 = scmp.eq.s32.totalorder %s23, 1
      %p161 = por %p159, %p160
      %p162 = scmp.ne.s32.totalorder %s153, %s154
      %p163 = scmp.eq.s32.totalorder %s23, 0
      %p164 = por %p162, %p163
      %p165 = scmp.ne.s32.totalorder %s153, %s154
      %p166 = scmp.eq.s32.totalorder %s24, 1
      %p167 = por %p165, %p166
      %p169 = scmp.ne.s32.totalorder %s154, %s168
      %p170 = scmp.eq.s32.totalorder %s24, 0
      %p171 = por %p169, %p170
      %s173 = sadd.s32 %s172, 1
      %p176 = scmp.eq.s32.totalorder %s18, 1
      %p177 = scmp.ne.s32.totalorder %s172, %s174
      %p178 = scmp.eq.s32.totalorder %s18, 0
      %p179 = por %p177, %p178
      %p180 = scmp.ne.s32.totalorder %s172, %s174
      %p181 = scmp.eq.s32.totalorder %s23, 1
      %p182 = por %p180, %p181
      %p183 = scmp.ne.s32.totalorder %s174, %s175
      %p184 = scmp.eq.s32.totalorder %s23, 0
      %p185 = por %p183, %p184
      %p186 = scmp.ne.s32.totalorder %s174, %s175
      %p187 = scmp.eq.s32.totalorder %s24, 1
      %p188 = por %p186, %p187
      %p190 = scmp.ne.s32.totalorder %s175, %s189
      %p191 = scmp.eq.s32.totalorder %s24, 0
      %p192 = por %p190, %p191
      %s194 = sadd.s32 %s193, 1
      %p197 = scmp.eq.s32.totalorder %s18, 1
      %p198 = scmp.ne.s32.totalorder %s193, %s195
      %p199 = scmp.eq.s32.totalorder %s18, 0
      %p200 = por %p198, %p199
      %p201 = scmp.ne.s32.totalorder %s193, %s195
      %p202 = scmp.eq.s32.totalorder %s23, 1
      %p203 = por %p201, %p202
      %p204 = scmp.ne.s32.totalorder %s195, %s196
      %p205 = scmp.eq.s32.totalorder %s23, 0
      %p206 = por %p204, %p205
      %p207 = scmp.ne.s32.totalorder %s195, %s196
      %p208 = scmp.eq.s32.totalorder %s24, 1
      %p209 = por %p207, %p208
      %p211 = scmp.ne.s32.totalorder %s196, %s210
      %p212 = scmp.eq.s32.totalorder %s24, 0
      %p213 = por %p211, %p212
      %s215 = sadd.s32 %s214, 1
      %p218 = scmp.eq.s32.totalorder %s18, 1
      %p219 = scmp.ne.s32.totalorder %s214, %s216
      %p220 = scmp.eq.s32.totalorder %s18, 0
      %p221 = por %p219, %p220
      %p222 = scmp.ne.s32.totalorder %s214, %s216
      %p223 = scmp.eq.s32.totalorder %s23, 1
      %p224 = por %p222, %p223
      %p225 = scmp.ne.s32.totalorder %s216, %s217
      %p226 = scmp.eq.s32.totalorder %s23, 0
      %p227 = por %p225, %p226
      %p228 = scmp.ne.s32.totalorder %s216, %s217
      %p229 = scmp.eq.s32.totalorder %s24, 1
      %p230 = por %p228, %p229
      %p232 = scmp.ne.s32.totalorder %s217, %s231
      %p233 = scmp.eq.s32.totalorder %s24, 0
      %p234 = por %p232, %p233
      %s235 = ssub.s32 %s18, %s25
      %p236 = scmp.eq.s32.totalorder %s235, 0
      %s238 = sadd.s32 %s237, 1
      %s239 = scalar_select %p236, %s237, %s238
      %p242 = pneg %p236
      %p243 = scmp.eq.s32.totalorder %s18, 1
      %p244 = por %p242, %p243
      %p245 = scmp.ne.s32.totalorder %s237, %s240
      %p246 = scmp.eq.s32.totalorder %s18, 0
      %p247 = por %p245, %p246
      %p248 = scmp.ne.s32.totalorder %s237, %s240
      %p249 = scmp.eq.s32.totalorder %s23, 1
      %p250 = por %p248, %p249
      %p251 = scmp.ne.s32.totalorder %s240, %s241
      %p252 = scmp.eq.s32.totalorder %s23, 0
      %p253 = por %p251, %p252
      %p254 = scmp.ne.s32.totalorder %s240, %s241
      %p255 = scmp.eq.s32.totalorder %s24, 1
      %p256 = por %p254, %p255
      %p258 = scmp.ne.s32.totalorder %s241, %s257
      %p259 = scmp.eq.s32.totalorder %s24, 0
      %p260 = por %p258, %p259
      %p261 = scmp.le.s32.totalorder 1, %s18
      %p262 = scmp.lt.s32.totalorder %s18, 3
      %p263 = pnand %p261, %p262
      %p264 = pneg %p263
      // Predicated region
      $region9: #{_lambda_.1} parent=5 // pred_check
        _
      $region10: #{_lambda_.1} parent=5 // pred_check_branch
        %266 = sbr.rel (%p263) target = $region12
      $region11: #{_lambda_.1} parent=5 // pred_region
        %s267 = ssub.s32 %s18, 1
        // Predicated region
        $region13: #{_lambda_.1} parent=11 // pred_check
          %p268 = pneg %p143
        $region14: #{_lambda_.1} parent=11 // pred_check_branch
          %270 = sbr.rel (%p268) target = $region16
        $region15: #{_lambda_.1} parent=11 // pred_region
          _
        $region16: #{_lambda_.1} parent=11 // pred_fallthru
          _
        // Predicated region
        $region17: #{_lambda_.1} parent=11 // pred_check
          %p271 = pneg %p164
        $region18: #{_lambda_.1} parent=11 // pred_check_branch
          %273 = sbr.rel (%p271) target = $region20
        $region19: #{_lambda_.1} parent=11 // pred_region
          _
        $region20: #{_lambda_.1} parent=11 // pred_fallthru
          _
        // Predicated region
        $region21: #{_lambda_.1} parent=11 // pred_check
          %p274 = pneg %p185
        $region22: #{_lambda_.1} parent=11 // pred_check_branch
          %276 = sbr.rel (%p274) target = $region24
        $region23: #{_lambda_.1} parent=11 // pred_region
          _
        $region24: #{_lambda_.1} parent=11 // pred_fallthru
          _
        // Predicated region
        $region25: #{_lambda_.1} parent=11 // pred_check
          %p277 = pneg %p206
        $region26: #{_lambda_.1} parent=11 // pred_check_branch
          %279 = sbr.rel (%p277) target = $region28
        $region27: #{_lambda_.1} parent=11 // pred_region
          _
        $region28: #{_lambda_.1} parent=11 // pred_fallthru
          _
        // Predicated region
        $region29: #{_lambda_.1} parent=11 // pred_check
          %p280 = pneg %p227
        $region30: #{_lambda_.1} parent=11 // pred_check_branch
          %282 = sbr.rel (%p280) target = $region32
        $region31: #{_lambda_.1} parent=11 // pred_region
          _
        $region32: #{_lambda_.1} parent=11 // pred_fallthru
          _
      $region12: #{_lambda_.1} parent=5 // pred_fallthru
        _
      %p283 = scmp.lt.s32.totalorder %s18, 2
      // Predicated region
      $region33: #{_lambda_.1} parent=5 // pred_check
        %p284 = pneg %p283
      $region34: #{_lambda_.1} parent=5 // pred_check_branch
        %286 = sbr.rel (%p284) target = $region36
      $region35: #{_lambda_.1} parent=5 // pred_region
        // Predicated region
        $region37: #{_lambda_.1} parent=35 // pred_check
          %p287 = pneg %p38
        $region38: #{_lambda_.1} parent=35 // pred_check_branch
          %289 = sbr.rel (%p287) target = $region40
        $region39: #{_lambda_.1} parent=35 // pred_region
          %s290 = smul.u32 8, %s18
          %p291 = scmp.lt.s32.totalorder %s290, 15
          %s292 = scalar_select %p291, %s290, 15
          %s293 = smul.addr %s292, 8
          %s294 = scalar_lea.vmem %s0, %s293
          %s295 = smul.u32 8, %s18
        $region40: #{_lambda_.1} parent=35 // pred_fallthru
          _
        // Predicated region
        $region41: #{_lambda_.1} parent=35 // pred_check
          %p296 = pneg %p64
        $region42: #{_lambda_.1} parent=35 // pred_check_branch
          %298 = sbr.rel (%p296) target = $region44
        $region43: #{_lambda_.1} parent=35 // pred_region
          %p299 = scmp.lt.s32.totalorder %s18, 1
          %s300 = scalar_select %p299, %s18, 1
          %s301 = smul.addr %s300, 8
          %s302 = scalar_lea.vmem %s1, %s301
        $region44: #{_lambda_.1} parent=35 // pred_fallthru
          _
        // Predicated region
        $region45: #{_lambda_.1} parent=35 // pred_check
          %p303 = pneg %p90
        $region46: #{_lambda_.1} parent=35 // pred_check_branch
          %305 = sbr.rel (%p303) target = $region48
        $region47: #{_lambda_.1} parent=35 // pred_region
          %p306 = scmp.lt.s32.totalorder %s18, 1
          %s307 = scalar_select %p306, %s18, 1
          %s308 = smul.addr %s307, 8
          %s309 = scalar_lea.vmem %s2, %s308
        $region48: #{_lambda_.1} parent=35 // pred_fallthru
          _
        // Predicated region
        $region49: #{_lambda_.1} parent=35 // pred_check
          %p310 = pneg %p116
        $region50: #{_lambda_.1} parent=35 // pred_check_branch
          %312 = sbr.rel (%p310) target = $region52
        $region51: #{_lambda_.1} parent=35 // pred_region
          %p313 = scmp.lt.s32.totalorder %s18, 1
          %s314 = scalar_select %p313, %s18, 1
          %s315 = smul.addr %s314, 8
          %s316 = scalar_lea.vmem %s3, %s315
        $region52: #{_lambda_.1} parent=35 // pred_fallthru
          _
      $region36: #{_lambda_.1} parent=5 // pred_fallthru
        _
      %p317 = scmp.le.s32.totalorder 1, %s18
      %p318 = scmp.lt.s32.totalorder %s18, 3
      %p319 = pnand %p317, %p318
      %p320 = pneg %p319
      // Predicated region
      $region53: #{_lambda_.1} parent=5 // pred_check
        _
      $region54: #{_lambda_.1} parent=5 // pred_check_branch
        %322 = sbr.rel (%p319) target = $region56
      $region55: #{_lambda_.1} parent=5 // pred_region
        %s323 = ssub.s32 %s18, 1
        %s324 = smul.u32 8, %s23
        %p325 = scmp.lt.s32.totalorder %s324, 15
        %s326 = scalar_select %p325, %s324, 15
        %s327 = smul.addr %s326, 8
        %s328 = scalar_lea.vmem %s0, %s327
        %p329 = pneg %p44
        %p330 = pneg %p41
        %p331 = scmp.lt.s32.totalorder %s23, 1
        %s332 = scalar_select %p331, %s23, 1
        %s333 = smul.addr %s332, 8
        %s334 = scalar_lea.vmem %s1, %s333
        %p335 = pneg %p70
        %p336 = pneg %p67
        %p337 = scmp.lt.s32.totalorder %s23, 1
        %s338 = scalar_select %p337, %s23, 1
        %s339 = smul.addr %s338, 8
        %s340 = scalar_lea.vmem %s2, %s339
        %p341 = pneg %p96
        %p342 = pneg %p93
        %p343 = scmp.lt.s32.totalorder %s23, 1
        %s344 = scalar_select %p343, %s23, 1
        %s345 = smul.addr %s344, 8
        %s346 = scalar_lea.vmem %s3, %s345
        %p347 = pneg %p122
        %p348 = pneg %p119
        %p349 = pneg %p143
        %p350 = pneg %p140
        %p351 = pneg %p164
        %p352 = pneg %p161
        %p353 = pneg %p185
        %p354 = pneg %p182
        %p355 = pneg %p206
        %p356 = pneg %p203
        %p357 = pneg %p227
        %p358 = pneg %p224
        %p359 = pneg %p253
        %p360 = pneg %p250
        %s361 = sand.u32 %s240, 1
        %s362 = scalar_lea.sflag [#allocation3], %s361
        %s363 = sand.u32 %s240, 1
        %s364 = smul.addr %s363, 8
        %s365 = scalar_lea.vmem [#allocation2], %s364
        %s366 = smul.u32 8, %s23
        %p367 = scmp.lt.s32.totalorder %s366, 15
        %s368 = scalar_select %p367, %s366, 15
        %s369 = smul.addr %s368, 8
        %s370 = scalar_lea.vmem %s0, %s369
        %s371 = smul.u32 8, %s23
        %p372 = scmp.lt.s32.totalorder %s23, 1
        %s373 = scalar_select %p372, %s23, 1
        %s374 = smul.addr %s373, 8
        %s375 = scalar_lea.vmem %s1, %s374
        %p376 = scmp.lt.s32.totalorder %s23, 1
        %s377 = scalar_select %p376, %s23, 1
        %s378 = smul.addr %s377, 8
        %s379 = scalar_lea.vmem %s2, %s378
        %p380 = scmp.lt.s32.totalorder %s23, 1
        %s381 = scalar_select %p380, %s23, 1
        %s382 = smul.addr %s381, 8
        %s383 = scalar_lea.vmem %s3, %s382
        %v385 = vld [vmem:[%s370] sm:$0xff]
        %v386 = vld [vmem:[%s370 + $0x8] sm:$0xff]
        %v387 = vld [vmem:[%s370 + $0x10] sm:$0xff]
        %v388 = vld [vmem:[%s370 + $0x18] sm:$0xff]
        %v389 = vld [vmem:[%s370 + $0x20] sm:$0xff]
        %v390 = vld [vmem:[%s370 + $0x28] sm:$0xff]
        %v391 = vld [vmem:[%s370 + $0x30] sm:$0xff]
        %v392 = vld [vmem:[%s370 + $0x38] sm:$0xff]
        %v393 = vpack.c.bf16 %v385, %v385
        %v394 = vpack.c.bf16 %v386, %v386
        %v395 = vpack.c.bf16 %v387, %v387
        %v396 = vpack.c.bf16 %v388, %v388
        %v397 = vpack.c.bf16 %v389, %v389
        %v398 = vpack.c.bf16 %v390, %v390
        %v399 = vpack.c.bf16 %v391, %v391
        %v400 = vpack.c.bf16 %v392, %v392
        %v401 = vld [vmem:[%s379] sm:$0xff]
        %v402 = vpack.c.bf16 %v401, %v401
        %v403 = vld [vmem:[%s375] sm:$0xff]
        %v404 = vld [vmem:[%s5] sm:$0x1]
        %v405 = vld [vmem:[%s6] sm:$0x1]
        %v408 = vunpack.c.l.s4 1966171168
        %v409 = vunpack.c.0.s8 %v408
        %v410 = vlaneseq
        %v411 = vshrl.u32 %v410, 7
        %v412 = vsub.s32 %v409, %v411
        %v413 = vrot.slane %v402, %v412
        %v414 = vcombine.high %v413, %v413
        %v416 = vunpack.c.l.s4 1966171168
        %v417 = vunpack.c.0.s8 %v416
        %v418 = vlaneseq
        %v419 = vshrl.u32 %v418, 7
        %v420 = vsub.s32 %v417, %v419
        %v421 = vrot.slane %v413, %v420
        %v423 = vunpack.c.l.s4 1966171168
        %v424 = vunpack.c.0.s8 %v423
        %v425 = vlaneseq
        %v426 = vshrl.u32 %v425, 7
        %v427 = vsub.s32 %v424, %v426
        %v428 = vrot.slane %v414, %v427
        %v429 = vcombine.high %v421, %v421
        %v430 = vcombine.high %v428, %v428
        %v431 = vunpack.i.l.s16 %v421
        %v432 = vunpack.i.h.s16 %v421
        %v433 = vunpack.i.l.s16 %v428
        %v434 = vunpack.i.h.s16 %v428
        %v435 = vunpack.i.l.s16 %v429
        %v436 = vunpack.i.h.s16 %v429
        %v437 = vunpack.i.l.s16 %v430
        %v438 = vunpack.i.h.s16 %v430
        %v439 = vpack.i.b16 %v431, %v431
        %v440 = vpack.i.b16 %v432, %v432
        %v441 = vpack.i.b16 %v433, %v433
        %v442 = vpack.i.b16 %v434, %v434
        %v443 = vpack.i.b16 %v435, %v435
        %v444 = vpack.i.b16 %v436, %v436
        %v445 = vpack.i.b16 %v437, %v437
        %v446 = vpack.i.b16 %v438, %v438
        %v447 = vlaneseq
        %v448 = vshrl.u32 %v447, 7
        %v449 = vsub.s32 0, %v448
        %v450 = vrot.slane %v439, %v449
        %v451 = vlaneseq
        %v452 = vshrl.u32 %v451, 7
        %v453 = vsub.s32 0, %v452
        %v454 = vrot.slane %v440, %v453
        %v455 = vlaneseq
        %v456 = vshrl.u32 %v455, 7
        %v457 = vsub.s32 0, %v456
        %v458 = vrot.slane %v441, %v457
        %v459 = vlaneseq
        %v460 = vshrl.u32 %v459, 7
        %v461 = vsub.s32 0, %v460
        %v462 = vrot.slane %v442, %v461
        %v463 = vlaneseq
        %v464 = vshrl.u32 %v463, 7
        %v465 = vsub.s32 0, %v464
        %v466 = vrot.slane %v443, %v465
        %v467 = vlaneseq
        %v468 = vshrl.u32 %v467, 7
        %v469 = vsub.s32 0, %v468
        %v470 = vrot.slane %v444, %v469
        %v471 = vlaneseq
        %v472 = vshrl.u32 %v471, 7
        %v473 = vsub.s32 0, %v472
        %v474 = vrot.slane %v445, %v473
        %v475 = vlaneseq
        %v476 = vshrl.u32 %v475, 7
        %v477 = vsub.s32 0, %v476
        %v478 = vrot.slane %v446, %v477
        %v480 = vpack.i.b16 %v450, %v450
        %v482 = vlaneseq
        %v483 = vshrl.u32 %v482, 7
        %v484 = vsub.s32 0, %v483
        %v485 = vrot.slane %v480, %v484
        %v487 = vpack.i.b16 %v454, %v454
        %v489 = vlaneseq
        %v490 = vshrl.u32 %v489, 7
        %v491 = vsub.s32 0, %v490
        %v492 = vrot.slane %v487, %v491
        %v494 = vpack.i.b16 %v458, %v458
        %v496 = vlaneseq
        %v497 = vshrl.u32 %v496, 7
        %v498 = vsub.s32 0, %v497
        %v499 = vrot.slane %v494, %v498
        %v501 = vpack.i.b16 %v462, %v462
        %v503 = vlaneseq
        %v504 = vshrl.u32 %v503, 7
        %v505 = vsub.s32 0, %v504
        %v506 = vrot.slane %v501, %v505
        %v508 = vpack.i.b16 %v466, %v466
        %v510 = vlaneseq
        %v511 = vshrl.u32 %v510, 7
        %v512 = vsub.s32 0, %v511
        %v513 = vrot.slane %v508, %v512
        %v515 = vpack.i.b16 %v470, %v470
        %v517 = vlaneseq
        %v518 = vshrl.u32 %v517, 7
        %v519 = vsub.s32 0, %v518
        %v520 = vrot.slane %v515, %v519
        %v522 = vpack.i.b16 %v474, %v474
        %v524 = vlaneseq
        %v525 = vshrl.u32 %v524, 7
        %v526 = vsub.s32 0, %v525
        %v527 = vrot.slane %v522, %v526
        %v529 = vpack.i.b16 %v478, %v478
        %v531 = vlaneseq
        %v532 = vshrl.u32 %v531, 7
        %v533 = vsub.s32 0, %v532
        %v534 = vrot.slane %v529, %v533
        %v535 = vmul.bf16 %v485, %v393
        %v536 = vmul.bf16 %v492, %v394
        %v537 = vmul.bf16 %v499, %v395
        %v538 = vmul.bf16 %v506, %v396
        %v539 = vmul.bf16 %v513, %v397
        %v540 = vmul.bf16 %v520, %v398
        %v541 = vmul.bf16 %v527, %v399
        %v542 = vmul.bf16 %v534, %v400
        %v543 = vld [vmem:[%s4] sm:$0xf]
        %v544 = vld [vmem:[%s4 + $0x4] sm:$0xf]
        %v545 = vld [vmem:[%s4 + $0x8] sm:$0xf]
        %v546 = vld [vmem:[%s4 + $0xc] sm:$0xf]
        %v555 = vunpack.c.l.b16 %v535
        %v556 = vunpack.c.l.b16 %v536
        %v557 = vunpack.c.l.b16 %v537
        %v558 = vunpack.c.l.b16 %v538
        %v559 = vunpack.c.l.b16 %v539
        %v560 = vunpack.c.l.b16 %v540
        %v561 = vunpack.c.l.b16 %v541
        %v562 = vunpack.c.l.b16 %v542
        %v563 = vpack.c.b16 %v556, %v555
        %v564 = vpack.c.b16 %v558, %v557
        %v565 = vpack.c.b16 %v560, %v559
        %v566 = vpack.c.b16 %v562, %v561
        %v571 = vunpack.c.l.b16 %v543
        %v572 = vunpack.c.l.b16 %v544
        %v573 = vunpack.c.l.b16 %v545
        %v574 = vunpack.c.l.b16 %v546
        %v575 = vpack.c.b16 %v572, %v571
        %v576 = vpack.c.b16 %v574, %v573
        %vm579 = vcmask 261120
        %v581 = vsel %vm579, %v563, 0
        %v584 = vsel %vm579, %v564, 0
        %v587 = vsel %vm579, %v565, 0
        %v590 = vsel %vm579, %v566, 0
        %592 = vmatprep.subr.bf16.mxu0 0
        %593 = vmatpush1.bf16.msra.mxu0 %v575
        %594 = vmatprep.subr.bf16.mxu0 0
        %595 = vmatpush1.bf16.msra.mxu0 %v576
        %596 = vmatprep.subr.bf16.mxu0 0
        %597 = vmatpush1.bf16.msra.mxu0 0
        %598 = vmatprep.subr.bf16.mxu0 0
        %599 = vmatpush1.bf16.msra.mxu0 0
        %600 = vmatprep.subr.bf16.mxu0 0
        %601 = vmatpush1.bf16.msra.mxu0 0
        %602 = vmatprep.subr.bf16.mxu0 0
        %603 = vmatpush1.bf16.msra.mxu0 0
        %604 = vmatprep.subr.bf16.mxu0 0
        %605 = vmatpush1.bf16.msra.mxu0 0
        %606 = vmatprep.subr.bf16.mxu0 0
        %607 = vmatpush1.bf16.msra.mxu0 0
        %608 = vmatprep.subr.bf16.mxu0 0
        %609 = vmatpush1.bf16.msra.mxu0 0
        %610 = vmatprep.subr.bf16.mxu0 0
        %611 = vmatpush1.bf16.msra.mxu0 0
        %612 = vmatprep.subr.bf16.mxu0 0
        %613 = vmatpush1.bf16.msra.mxu0 0
        %614 = vmatprep.subr.bf16.mxu0 0
        %615 = vmatpush1.bf16.msra.mxu0 0
        %616 = vmatprep.subr.bf16.mxu0 0
        %617 = vmatpush1.bf16.msra.mxu0 0
        %618 = vmatprep.subr.bf16.mxu0 0
        %619 = vmatpush1.bf16.msra.mxu0 0
        %620 = vmatprep.subr.bf16.mxu0 0
        %621 = vmatpush1.bf16.msra.mxu0 0
        %622 = vmatprep.subr.bf16.mxu0 0
        %623 = vmatpush1.bf16.msra.mxu0 0
        %624 = vmatprep.mubr.bf16.mxu0 0
        %625 = vmatmul.mubr.bf16.gmra.mrb[0].mxu0 %v581
        %v626 = vpop.f32.mrb[0].mxu0
        %v627 = vadd.f32 0.0, %v626
        %v628 = vpop.f32.mrb[0].mxu0
        %v629 = vpop.f32.mrb[0].mxu0
        %v630 = vadd.f32 0.0, %v629
        %v631 = vpop.f32.mrb[0].mxu0
        %632 = vmatprep.mubr.bf16.mxu0 0
        %633 = vmatmul.mubr.bf16.gmra.mrb[0].mxu0 %v584
        %v634 = vpop.f32.mrb[0].mxu0
        %v635 = vadd.f32 0.0, %v634
        %v636 = vpop.f32.mrb[0].mxu0
        %v637 = vpop.f32.mrb[0].mxu0
        %v638 = vadd.f32 0.0, %v637
        %v639 = vpop.f32.mrb[0].mxu0
        %640 = vmatprep.mubr.bf16.mxu0 0
        %641 = vmatmul.mubr.bf16.gmra.mrb[0].mxu0 %v587
        %v642 = vpop.f32.mrb[0].mxu0
        %v643 = vadd.f32 0.0, %v642
        %v644 = vpop.f32.mrb[0].mxu0
        %v645 = vpop.f32.mrb[0].mxu0
        %v646 = vadd.f32 0.0, %v645
        %v647 = vpop.f32.mrb[0].mxu0
        %648 = vmatprep.mubr.bf16.mxu0 0
        %649 = vmatmul.mubr.bf16.gmra.mrb[0].mxu0 %v590
        %v650 = vpop.f32.mrb[0].mxu0
        %v651 = vadd.f32 0.0, %v650
        %v652 = vpop.f32.mrb[0].mxu0
        %v653 = vpop.f32.mrb[0].mxu0
        %v654 = vadd.f32 0.0, %v653
        %v655 = vpop.f32.mrb[0].mxu0
        %656 = vdwg.mxu0
        %v657 = vlaneseq
        %v658 = vshrl.u32 %v657, 7
        %v659 = vsub.s32 0, %v658
        %v660 = vrot.slane %v403, %v659
        %662 = vbcast.lane.b32.xlu0 %v660, 256
        %v663 = vpop.permute.xlu0 %662
        %v664 = vlaneseq
        %v665 = vshrl.u32 %v664, 7
        %v666 = vsub.s32 1, %v665
        %v667 = vrot.slane %v403, %v666
        %669 = vbcast.lane.b32.xlu0 %v667, 256
        %v670 = vpop.permute.xlu0 %669
        %v671 = vlaneseq
        %v672 = vshrl.u32 %v671, 7
        %v673 = vsub.s32 2, %v672
        %v674 = vrot.slane %v403, %v673
        %676 = vbcast.lane.b32.xlu0 %v674, 256
        %v677 = vpop.permute.xlu0 %676
        %v678 = vlaneseq
        %v679 = vshrl.u32 %v678, 7
        %v680 = vsub.s32 3, %v679
        %v681 = vrot.slane %v403, %v680
        %683 = vbcast.lane.b32.xlu0 %v681, 256
        %v684 = vpop.permute.xlu0 %683
        %v685 = vlaneseq
        %v686 = vshrl.u32 %v685, 7
        %v687 = vsub.s32 4, %v686
        %v688 = vrot.slane %v403, %v687
        %690 = vbcast.lane.b32.xlu0 %v688, 256
        %v691 = vpop.permute.xlu0 %690
        %v692 = vlaneseq
        %v693 = vshrl.u32 %v692, 7
        %v694 = vsub.s32 5, %v693
        %v695 = vrot.slane %v403, %v694
        %697 = vbcast.lane.b32.xlu0 %v695, 256
        %v698 = vpop.permute.xlu0 %697
        %v699 = vlaneseq
        %v700 = vshrl.u32 %v699, 7
        %v701 = vsub.s32 6, %v700
        %v702 = vrot.slane %v403, %v701
        %704 = vbcast.lane.b32.xlu0 %v702, 256
        %v705 = vpop.permute.xlu0 %704
        %v706 = vlaneseq
        %v707 = vshrl.u32 %v706, 7
        %v708 = vsub.s32 7, %v707
        %v709 = vrot.slane %v403, %v708
        %711 = vbcast.lane.b32.xlu0 %v709, 256
        %v712 = vpop.permute.xlu0 %711
        %v714 = vlaneseq
        %v715 = vshrl.u32 %v714, 7
        %v716 = vsub.s32 0, %v715
        %v717 = vrot.slane %v404, %v716
        %v719 = vmul.f32 %v663, %v717
        %v720 = vmul.f32 %v670, %v717
        %v721 = vmul.f32 %v677, %v717
        %v722 = vmul.f32 %v684, %v717
        %v723 = vmul.f32 %v691, %v717
        %v724 = vmul.f32 %v698, %v717
        %v725 = vmul.f32 %v705, %v717
        %v726 = vmul.f32 %v712, %v717
        %v727 = vadd.f32 %v627, %v719
        %v728 = vadd.f32 %v630, %v720
        %v729 = vadd.f32 %v635, %v721
        %v730 = vadd.f32 %v638, %v722
        %v731 = vadd.f32 %v643, %v723
        %v732 = vadd.f32 %v646, %v724
        %v733 = vadd.f32 %v651, %v725
        %v734 = vadd.f32 %v654, %v726
        %vm735 = vcmp.ge.f32.partialorder %v727, 0.0
        %vm736 = vcmp.ge.f32.partialorder %v728, 0.0
        %vm737 = vcmp.ge.f32.partialorder %v729, 0.0
        %vm738 = vcmp.ge.f32.partialorder %v730, 0.0
        %vm739 = vcmp.ge.f32.partialorder %v731, 0.0
        %vm740 = vcmp.ge.f32.partialorder %v732, 0.0
        %vm741 = vcmp.ge.f32.partialorder %v733, 0.0
        %vm742 = vcmp.ge.f32.partialorder %v734, 0.0
        %v743 = vmul.f32 %v727, 0.2
        %v744 = vmul.f32 %v728, 0.2
        %v745 = vmul.f32 %v729, 0.2
        %v746 = vmul.f32 %v730, 0.2
        %v747 = vmul.f32 %v731, 0.2
        %v748 = vmul.f32 %v732, 0.2
        %v749 = vmul.f32 %v733, 0.2
        %v750 = vmul.f32 %v734, 0.2
        %v751 = vsel %vm735, %v727, %v743
        %v752 = vsel %vm736, %v728, %v744
        %v753 = vsel %vm737, %v729, %v745
        %v754 = vsel %vm738, %v730, %v746
        %v755 = vsel %vm739, %v731, %v747
        %v756 = vsel %vm740, %v732, %v748
        %v757 = vsel %vm741, %v733, %v749
        %v758 = vsel %vm742, %v734, %v750
        %v760 = vlaneseq
        %v761 = vshrl.u32 %v760, 7
        %v762 = vsub.s32 0, %v761
        %v763 = vrot.slane %v405, %v762
        %v765 = vmul.f32 %v751, %v763
        %v766 = vmul.f32 %v752, %v763
        %v767 = vmul.f32 %v753, %v763
        %v768 = vmul.f32 %v754, %v763
        %v769 = vmul.f32 %v755, %v763
        %v770 = vmul.f32 %v756, %v763
        %v771 = vmul.f32 %v757, %v763
        %v772 = vmul.f32 %v758, %v763
        %v773 = vsel %vm579, %v765, 0.0
        %774 = vadd.xlane.f32.xlu0 %v773
        %v775 = vpop.xlane.xlu0 %774
        %v776 = vsel %vm579, %v766, 0.0
        %777 = vadd.xlane.f32.xlu0 %v776
        %v778 = vpop.xlane.xlu0 %777
        %v779 = vsel %vm579, %v767, 0.0
        %780 = vadd.xlane.f32.xlu0 %v779
        %v781 = vpop.xlane.xlu0 %780
        %v782 = vsel %vm579, %v768, 0.0
        %783 = vadd.xlane.f32.xlu0 %v782
        %v784 = vpop.xlane.xlu0 %783
        %v785 = vsel %vm579, %v769, 0.0
        %786 = vadd.xlane.f32.xlu0 %v785
        %v787 = vpop.xlane.xlu0 %786
        %v788 = vsel %vm579, %v770, 0.0
        %789 = vadd.xlane.f32.xlu0 %v788
        %v790 = vpop.xlane.xlu0 %789
        %v791 = vsel %vm579, %v771, 0.0
        %792 = vadd.xlane.f32.xlu0 %v791
        %v793 = vpop.xlane.xlu0 %792
        %v794 = vsel %vm579, %v772, 0.0
        %795 = vadd.xlane.f32.xlu0 %v794
        %v796 = vpop.xlane.xlu0 %795
        %v805 = vlaneseq
        %v806 = vand.u32 %v805, 127
        %v807 = vlaneseq
        %v808 = vshrl.u32 %v807, 7
        %v809 = vsub.s32 %v806, %v808
        %v810 = vrot.slane %v775, %v809
        %v811 = vlaneseq
        %v812 = vshrl.u32 %v811, 7
        %v813 = vsub.s32 %v806, %v812
        %v814 = vrot.slane %v778, %v813
        %v815 = vlaneseq
        %v816 = vshrl.u32 %v815, 7
        %v817 = vsub.s32 %v806, %v816
        %v818 = vrot.slane %v781, %v817
        %v819 = vlaneseq
        %v820 = vshrl.u32 %v819, 7
        %v821 = vsub.s32 %v806, %v820
        %v822 = vrot.slane %v784, %v821
        %v823 = vlaneseq
        %v824 = vshrl.u32 %v823, 7
        %v825 = vsub.s32 %v806, %v824
        %v826 = vrot.slane %v787, %v825
        %v827 = vlaneseq
        %v828 = vshrl.u32 %v827, 7
        %v829 = vsub.s32 %v806, %v828
        %v830 = vrot.slane %v790, %v829
        %v831 = vlaneseq
        %v832 = vshrl.u32 %v831, 7
        %v833 = vsub.s32 %v806, %v832
        %v834 = vrot.slane %v793, %v833
        %v835 = vlaneseq
        %v836 = vshrl.u32 %v835, 7
        %v837 = vsub.s32 %v806, %v836
        %v838 = vrot.slane %v796, %v837
        %vm839 = vcmask 1041409
        %v840 = vsel %vm839, %v814, %v810
        %vm841 = vcmask 1042434
        %v842 = vsel %vm841, %v818, %v840
        %vm843 = vcmask 1043459
        %v844 = vsel %vm843, %v822, %v842
        %vm845 = vcmask 1044484
        %v846 = vsel %vm845, %v826, %v844
        %vm847 = vcmask 1045509
        %v848 = vsel %vm847, %v830, %v846
        %vm849 = vcmask 1046534
        %v850 = vsel %vm849, %v834, %v848
        %vm851 = vcmask 1047559
        %v852 = vsel %vm851, %v838, %v850
        %vm854 = vcmask 64512
        %v855 = vsel %vm854, %v852, -inf
        %856 = vmax.xlane.f32.xlu0 %v855
        %v857 = vpop.xlane.xlu0 %856
        %v859 = vlaneseq
        %v860 = vshrl.u32 %v859, 7
        %v861 = vsub.s32 0, %v860
        %v862 = vrot.slane %v857, %v861
        %v863 = vlaneseq
        %v864 = vshrl.u32 %v863, 7
        %v865 = vsub.s32 1, %v864
        %v866 = vrot.slane %v857, %v865
        %v867 = vlaneseq
        %v868 = vshrl.u32 %v867, 7
        %v869 = vsub.s32 2, %v868
        %v870 = vrot.slane %v857, %v869
        %v871 = vlaneseq
        %v872 = vshrl.u32 %v871, 7
        %v873 = vsub.s32 3, %v872
        %v874 = vrot.slane %v857, %v873
        %v875 = vlaneseq
        %v876 = vshrl.u32 %v875, 7
        %v877 = vsub.s32 4, %v876
        %v878 = vrot.slane %v857, %v877
        %v879 = vlaneseq
        %v880 = vshrl.u32 %v879, 7
        %v881 = vsub.s32 5, %v880
        %v882 = vrot.slane %v857, %v881
        %v883 = vlaneseq
        %v884 = vshrl.u32 %v883, 7
        %v885 = vsub.s32 6, %v884
        %v886 = vrot.slane %v857, %v885
        %v887 = vlaneseq
        %v888 = vshrl.u32 %v887, 7
        %v889 = vsub.s32 7, %v888
        %v890 = vrot.slane %v857, %v889
        %v899 = vsub.f32 %v775, %v862
        %v900 = vsub.f32 %v778, %v866
        %v901 = vsub.f32 %v781, %v870
        %v902 = vsub.f32 %v784, %v874
        %v903 = vsub.f32 %v787, %v878
        %v904 = vsub.f32 %v790, %v882
        %v905 = vsub.f32 %v793, %v886
        %v906 = vsub.f32 %v796, %v890
        %v907 = vmul.f32 %v899, 1.442695
        %v908 = vpow.pop %v907
        %v909 = vmul.f32 %v900, 1.442695
        %v910 = vpow.pop %v909
        %v911 = vmul.f32 %v901, 1.442695
        %v912 = vpow.pop %v911
        %v913 = vmul.f32 %v902, 1.442695
        %v914 = vpow.pop %v913
        %v915 = vmul.f32 %v903, 1.442695
        %v916 = vpow.pop %v915
        %v917 = vmul.f32 %v904, 1.442695
        %v918 = vpow.pop %v917
        %v919 = vmul.f32 %v905, 1.442695
        %v920 = vpow.pop %v919
        %v921 = vmul.f32 %v906, 1.442695
        %v922 = vpow.pop %v921
        %931 = vset.pattern.permute.xlu0 0
        %932 = vperm.xlu0 %931, %v908
        %v933 = vpop.permute.xlu0 %932
        %934 = vset.pattern.permute.xlu0 0
        %935 = vperm.xlu0 %934, %v910
        %v936 = vpop.permute.xlu0 %935
        %937 = vset.pattern.permute.xlu0 0
        %938 = vperm.xlu0 %937, %v912
        %v939 = vpop.permute.xlu0 %938
        %940 = vset.pattern.permute.xlu0 0
        %941 = vperm.xlu0 %940, %v914
        %v942 = vpop.permute.xlu0 %941
        %943 = vset.pattern.permute.xlu0 0
        %944 = vperm.xlu0 %943, %v916
        %v945 = vpop.permute.xlu0 %944
        %946 = vset.pattern.permute.xlu0 0
        %947 = vperm.xlu0 %946, %v918
        %v948 = vpop.permute.xlu0 %947
        %949 = vset.pattern.permute.xlu0 0
        %950 = vperm.xlu0 %949, %v920
        %v951 = vpop.permute.xlu0 %950
        %952 = vset.pattern.permute.xlu0 0
        %953 = vperm.xlu0 %952, %v922
        %v954 = vpop.permute.xlu0 %953
        %v955 = vlaneseq
        %v956 = vshrl.u32 %v955, 7
        %v957 = vsub.s32 %v806, %v956
        %v958 = vrot.slane %v933, %v957
        %v959 = vlaneseq
        %v960 = vshrl.u32 %v959, 7
        %v961 = vsub.s32 %v806, %v960
        %v962 = vrot.slane %v936, %v961
        %v963 = vlaneseq
        %v964 = vshrl.u32 %v963, 7
        %v965 = vsub.s32 %v806, %v964
        %v966 = vrot.slane %v939, %v965
        %v967 = vlaneseq
        %v968 = vshrl.u32 %v967, 7
        %v969 = vsub.s32 %v806, %v968
        %v970 = vrot.slane %v942, %v969
        %v971 = vlaneseq
        %v972 = vshrl.u32 %v971, 7
        %v973 = vsub.s32 %v806, %v972
        %v974 = vrot.slane %v945, %v973
        %v975 = vlaneseq
        %v976 = vshrl.u32 %v975, 7
        %v977 = vsub.s32 %v806, %v976
        %v978 = vrot.slane %v948, %v977
        %v979 = vlaneseq
        %v980 = vshrl.u32 %v979, 7
        %v981 = vsub.s32 %v806, %v980
        %v982 = vrot.slane %v951, %v981
        %v983 = vlaneseq
        %v984 = vshrl.u32 %v983, 7
        %v985 = vsub.s32 %v806, %v984
        %v986 = vrot.slane %v954, %v985
        %v987 = vsel %vm839, %v962, %v958
        %v988 = vsel %vm841, %v966, %v987
        %v989 = vsel %vm843, %v970, %v988
        %v990 = vsel %vm845, %v974, %v989
        %v991 = vsel %vm847, %v978, %v990
        %v992 = vsel %vm849, %v982, %v991
        %v993 = vsel %vm851, %v986, %v992
        %v995 = vsel %vm854, %v993, 0.0
        %996 = vadd.xlane.f32.xlu0 %v995
        %v997 = vpop.xlane.xlu0 %996
        %v998 = vrcp.pop %v997
        %v1000 = vlaneseq
        %v1001 = vshrl.u32 %v1000, 7
        %v1002 = vsub.s32 0, %v1001
        %v1003 = vrot.slane %v998, %v1002
        %v1004 = vlaneseq
        %v1005 = vshrl.u32 %v1004, 7
        %v1006 = vsub.s32 1, %v1005
        %v1007 = vrot.slane %v998, %v1006
        %v1008 = vlaneseq
        %v1009 = vshrl.u32 %v1008, 7
        %v1010 = vsub.s32 2, %v1009
        %v1011 = vrot.slane %v998, %v1010
        %v1012 = vlaneseq
        %v1013 = vshrl.u32 %v1012, 7
        %v1014 = vsub.s32 3, %v1013
        %v1015 = vrot.slane %v998, %v1014
        %v1016 = vlaneseq
        %v1017 = vshrl.u32 %v1016, 7
        %v1018 = vsub.s32 4, %v1017
        %v1019 = vrot.slane %v998, %v1018
        %v1020 = vlaneseq
        %v1021 = vshrl.u32 %v1020, 7
        %v1022 = vsub.s32 5, %v1021
        %v1023 = vrot.slane %v998, %v1022
        %v1024 = vlaneseq
        %v1025 = vshrl.u32 %v1024, 7
        %v1026 = vsub.s32 6, %v1025
        %v1027 = vrot.slane %v998, %v1026
        %v1028 = vlaneseq
        %v1029 = vshrl.u32 %v1028, 7
        %v1030 = vsub.s32 7, %v1029
        %v1031 = vrot.slane %v998, %v1030
        %v1040 = vmul.f32 %v908, %v1003
        %v1041 = vmul.f32 %v910, %v1007
        %v1042 = vmul.f32 %v912, %v1011
        %v1043 = vmul.f32 %v914, %v1015
        %v1044 = vmul.f32 %v916, %v1019
        %v1045 = vmul.f32 %v918, %v1023
        %v1046 = vmul.f32 %v920, %v1027
        %v1047 = vmul.f32 %v922, %v1031
        %v1048 = vpack.c.bf16 %v1040, %v1040
        %v1049 = vpack.c.bf16 %v1041, %v1041
        %v1050 = vpack.c.bf16 %v1042, %v1042
        %v1051 = vpack.c.bf16 %v1043, %v1043
        %v1052 = vpack.c.bf16 %v1044, %v1044
        %v1053 = vpack.c.bf16 %v1045, %v1045
        %v1054 = vpack.c.bf16 %v1046, %v1046
        %v1055 = vpack.c.bf16 %v1047, %v1047
        %1057 = vset.pattern.permute.xlu0 0
        %1058 = vperm.xlu0 %1057, %v1048
        %v1059 = vpop.permute.xlu0 %1058
        %1062 = vset.pattern.permute.xlu0 0
        %1063 = vperm.xlu0 %1062, %v1049
        %v1064 = vpop.permute.xlu0 %1063
        %1067 = vset.pattern.permute.xlu0 0
        %1068 = vperm.xlu0 %1067, %v1050
        %v1069 = vpop.permute.xlu0 %1068
        %1072 = vset.pattern.permute.xlu0 0
        %1073 = vperm.xlu0 %1072, %v1051
        %v1074 = vpop.permute.xlu0 %1073
        %1077 = vset.pattern.permute.xlu0 0
        %1078 = vperm.xlu0 %1077, %v1052
        %v1079 = vpop.permute.xlu0 %1078
        %1082 = vset.pattern.permute.xlu0 0
        %1083 = vperm.xlu0 %1082, %v1053
        %v1084 = vpop.permute.xlu0 %1083
        %1087 = vset.pattern.permute.xlu0 0
        %1088 = vperm.xlu0 %1087, %v1054
        %v1089 = vpop.permute.xlu0 %1088
        %1092 = vset.pattern.permute.xlu0 0
        %1093 = vperm.xlu0 %1092, %v1055
        %v1094 = vpop.permute.xlu0 %1093
        %v1096 = vmul.bf16 %v1059, %v393
        %v1097 = vmul.bf16 %v1064, %v394
        %v1098 = vmul.bf16 %v1069, %v395
        %v1099 = vmul.bf16 %v1074, %v396
        %v1100 = vmul.bf16 %v1079, %v397
        %v1101 = vmul.bf16 %v1084, %v398
        %v1102 = vmul.bf16 %v1089, %v399
        %v1103 = vmul.bf16 %v1094, %v400
        %v1104 = vunpack.c.l.bf16 %v1096
        %v1105 = vunpack.c.l.bf16 %v1097
        %v1106 = vunpack.c.l.bf16 %v1098
        %v1107 = vunpack.c.l.bf16 %v1099
        %v1108 = vunpack.c.l.bf16 %v1100
        %v1109 = vunpack.c.l.bf16 %v1101
        %v1110 = vunpack.c.l.bf16 %v1102
        %v1111 = vunpack.c.l.bf16 %v1103
        %v1112 = vsel %vm579, %v1104, 0.0
        %v1113 = vrot.slane %v1112, 4
        %v1114 = vadd.f32 %v1112, %v1113
        %v1115 = vrot.slane %v1114, 2
        %v1116 = vadd.f32 %v1114, %v1115
        %v1117 = vrot.slane %v1116, 1
        %v1118 = vadd.f32 %v1116, %v1117
        %v1119 = vsel %vm579, %v1105, 0.0
        %v1120 = vrot.slane %v1119, 4
        %v1121 = vadd.f32 %v1119, %v1120
        %v1122 = vrot.slane %v1121, 2
        %v1123 = vadd.f32 %v1121, %v1122
        %v1124 = vrot.slane %v1123, 1
        %v1125 = vadd.f32 %v1123, %v1124
        %v1126 = vsel %vm579, %v1106, 0.0
        %v1127 = vrot.slane %v1126, 4
        %v1128 = vadd.f32 %v1126, %v1127
        %v1129 = vrot.slane %v1128, 2
        %v1130 = vadd.f32 %v1128, %v1129
        %v1131 = vrot.slane %v1130, 1
        %v1132 = vadd.f32 %v1130, %v1131
        %v1133 = vsel %vm579, %v1107, 0.0
        %v1134 = vrot.slane %v1133, 4
        %v1135 = vadd.f32 %v1133, %v1134
        %v1136 = vrot.slane %v1135, 2
        %v1137 = vadd.f32 %v1135, %v1136
        %v1138 = vrot.slane %v1137, 1
        %v1139 = vadd.f32 %v1137, %v1138
        %v1140 = vsel %vm579, %v1108, 0.0
        %v1141 = vrot.slane %v1140, 4
        %v1142 = vadd.f32 %v1140, %v1141
        %v1143 = vrot.slane %v1142, 2
        %v1144 = vadd.f32 %v1142, %v1143
        %v1145 = vrot.slane %v1144, 1
        %v1146 = vadd.f32 %v1144, %v1145
        %v1147 = vsel %vm579, %v1109, 0.0
        %v1148 = vrot.slane %v1147, 4
        %v1149 = vadd.f32 %v1147, %v1148
        %v1150 = vrot.slane %v1149, 2
        %v1151 = vadd.f32 %v1149, %v1150
        %v1152 = vrot.slane %v1151, 1
        %v1153 = vadd.f32 %v1151, %v1152
        %v1154 = vsel %vm579, %v1110, 0.0
        %v1155 = vrot.slane %v1154, 4
        %v1156 = vadd.f32 %v1154, %v1155
        %v1157 = vrot.slane %v1156, 2
        %v1158 = vadd.f32 %v1156, %v1157
        %v1159 = vrot.slane %v1158, 1
        %v1160 = vadd.f32 %v1158, %v1159
        %v1161 = vsel %vm579, %v1111, 0.0
        %v1162 = vrot.slane %v1161, 4
        %v1163 = vadd.f32 %v1161, %v1162
        %v1164 = vrot.slane %v1163, 2
        %v1165 = vadd.f32 %v1163, %v1164
        %v1166 = vrot.slane %v1165, 1
        %v1167 = vadd.f32 %v1165, %v1166
        %v1168 = vld [vmem:[%s383] sm:$0xff]
        %v1169 = vpack.c.bf16 %v1168, %v1168
        %v1170 = vld [vmem:[%s7] sm:$0xf]
        %v1171 = vld [vmem:[%s7 + $0x4] sm:$0xf]
        %v1172 = vld [vmem:[%s7 + $0x8] sm:$0xf]
        %v1173 = vld [vmem:[%s7 + $0xc] sm:$0xf]
        %v1174 = vpack.c.bf16 %v1118, %v1118
        %v1175 = vpack.c.bf16 %v1125, %v1125
        %v1176 = vpack.c.bf16 %v1132, %v1132
        %v1177 = vpack.c.bf16 %v1139, %v1139
        %v1178 = vpack.c.bf16 %v1146, %v1146
        %v1179 = vpack.c.bf16 %v1153, %v1153
        %v1180 = vpack.c.bf16 %v1160, %v1160
        %v1181 = vpack.c.bf16 %v1167, %v1167
        %v1182 = vld [vmem:[%s8] sm:$0xf]
        %v1183 = vld [vmem:[%s8 + $0x4] sm:$0xf]
        %v1184 = vld [vmem:[%s8 + $0x8] sm:$0xf]
        %v1185 = vld [vmem:[%s8 + $0xc] sm:$0xf]
        %v1194 = vunpack.c.l.b16 %v1174
        %v1195 = vunpack.c.l.b16 %v1175
        %v1196 = vunpack.c.l.b16 %v1176
        %v1197 = vunpack.c.l.b16 %v1177
        %v1198 = vunpack.c.l.b16 %v1178
        %v1199 = vunpack.c.l.b16 %v1179
        %v1200 = vunpack.c.l.b16 %v1180
        %v1201 = vunpack.c.l.b16 %v1181
        %v1202 = vsel %vm839, %v1195, %v1194
        %v1203 = vsel %vm841, %v1196, %v1202
        %v1204 = vsel %vm843, %v1197, %v1203
        %v1205 = vsel %vm845, %v1198, %v1204
        %v1206 = vsel %vm847, %v1199, %v1205
        %v1207 = vsel %vm849, %v1200, %v1206
        %v1208 = vsel %vm851, %v1201, %v1207
        %v1209 = vpack.c.b16 %v1208, %v1208
        %v1214 = vunpack.c.l.b16 %v1182
        %v1215 = vunpack.c.l.b16 %v1183
        %v1216 = vunpack.c.l.b16 %v1184
        %v1217 = vunpack.c.l.b16 %v1185
        %v1218 = vpack.c.b16 %v1215, %v1214
        %v1219 = vpack.c.b16 %v1217, %v1216
        %v1223 = vsel %vm579, %v1209, 0
        %1225 = vmatprep.subr.bf16.mxu0 0
        %1226 = vmatpush1.bf16.msra.mxu0 %v1218
        %1227 = vmatprep.subr.bf16.mxu0 0
        %1228 = vmatpush1.bf16.msra.mxu0 %v1219
        %1229 = vmatprep.subr.bf16.mxu0 0
        %1230 = vmatpush1.bf16.msra.mxu0 0
        %1231 = vmatprep.subr.bf16.mxu0 0
        %1232 = vmatpush1.bf16.msra.mxu0 0
        %1233 = vmatprep.subr.bf16.mxu0 0
        %1234 = vmatpush1.bf16.msra.mxu0 0
        %1235 = vmatprep.subr.bf16.mxu0 0
        %1236 = vmatpush1.bf16.msra.mxu0 0
        %1237 = vmatprep.subr.bf16.mxu0 0
        %1238 = vmatpush1.bf16.msra.mxu0 0
        %1239 = vmatprep.subr.bf16.mxu0 0
        %1240 = vmatpush1.bf16.msra.mxu0 0
        %1241 = vmatprep.subr.bf16.mxu0 0
        %1242 = vmatpush1.bf16.msra.mxu0 0
        %1243 = vmatprep.subr.bf16.mxu0 0
        %1244 = vmatpush1.bf16.msra.mxu0 0
        %1245 = vmatprep.subr.bf16.mxu0 0
        %1246 = vmatpush1.bf16.msra.mxu0 0
        %1247 = vmatprep.subr.bf16.mxu0 0
        %1248 = vmatpush1.bf16.msra.mxu0 0
        %1249 = vmatprep.subr.bf16.mxu0 0
        %1250 = vmatpush1.bf16.msra.mxu0 0
        %1251 = vmatprep.subr.bf16.mxu0 0
        %1252 = vmatpush1.bf16.msra.mxu0 0
        %1253 = vmatprep.subr.bf16.mxu0 0
        %1254 = vmatpush1.bf16.msra.mxu0 0
        %1255 = vmatprep.subr.bf16.mxu0 0
        %1256 = vmatpush1.bf16.msra.mxu0 0
        %1257 = vmatprep.mubr.bf16.mxu0 0
        %1258 = vmatmul.mubr.bf16.gmra.mrb[0].mxu0 %v1223
        %v1259 = vpop.f32.mrb[0].mxu0
        %v1260 = vadd.f32 0.0, %v1259
        %v1261 = vpop.f32.mrb[0].mxu0
        %v1262 = vpop.f32.mrb[0].mxu0
        %v1263 = vpop.f32.mrb[0].mxu0
        %1264 = vdwg.mxu0
        %v1269 = vunpack.c.l.b16 %v1170
        %v1270 = vunpack.c.l.b16 %v1171
        %v1271 = vunpack.c.l.b16 %v1172
        %v1272 = vunpack.c.l.b16 %v1173
        %v1273 = vpack.c.b16 %v1270, %v1269
        %v1274 = vpack.c.b16 %v1272, %v1271
        %v1278 = vsel %vm579, %v1169, 0
        %1280 = vmatprep.subr.bf16.mxu0 0
        %1281 = vmatpush1.bf16.msra.mxu0 %v1273
        %1282 = vmatprep.subr.bf16.mxu0 0
        %1283 = vmatpush1.bf16.msra.mxu0 %v1274
        %1284 = vmatprep.subr.bf16.mxu0 0
        %1285 = vmatpush1.bf16.msra.mxu0 0
        %1286 = vmatprep.subr.bf16.mxu0 0
        %1287 = vmatpush1.bf16.msra.mxu0 0
        %1288 = vmatprep.subr.bf16.mxu0 0
        %1289 = vmatpush1.bf16.msra.mxu0 0
        %1290 = vmatprep.subr.bf16.mxu0 0
        %1291 = vmatpush1.bf16.msra.mxu0 0
        %1292 = vmatprep.subr.bf16.mxu0 0
        %1293 = vmatpush1.bf16.msra.mxu0 0
        %1294 = vmatprep.subr.bf16.mxu0 0
        %1295 = vmatpush1.bf16.msra.mxu0 0
        %1296 = vmatprep.subr.bf16.mxu0 0
        %1297 = vmatpush1.bf16.msra.mxu0 0
        %1298 = vmatprep.subr.bf16.mxu0 0
        %1299 = vmatpush1.bf16.msra.mxu0 0
        %1300 = vmatprep.subr.bf16.mxu0 0
        %1301 = vmatpush1.bf16.msra.mxu0 0
        %1302 = vmatprep.subr.bf16.mxu0 0
        %1303 = vmatpush1.bf16.msra.mxu0 0
        %1304 = vmatprep.subr.bf16.mxu0 0
        %1305 = vmatpush1.bf16.msra.mxu0 0
        %1306 = vmatprep.subr.bf16.mxu0 0
        %1307 = vmatpush1.bf16.msra.mxu0 0
        %1308 = vmatprep.subr.bf16.mxu0 0
        %1309 = vmatpush1.bf16.msra.mxu0 0
        %1310 = vmatprep.subr.bf16.mxu0 0
        %1311 = vmatpush1.bf16.msra.mxu0 0
        %1312 = vmatprep.mubr.bf16.mxu0 0
        %1313 = vmatmul.mubr.bf16.gmra.mrb[0].mxu0 %v1278
        %v1314 = vpop.f32.mrb[0].mxu0
        %v1315 = vadd.f32 %v1260, %v1314
        %v1316 = vpop.f32.mrb[0].mxu0
        %v1317 = vpop.f32.mrb[0].mxu0
        %v1318 = vpop.f32.mrb[0].mxu0
        %1319 = vdwg.mxu0
        %v1320 = vmax.f32 %v1315, 0.0
        %1321 = vst.msk [vmem:[%s365] sm:$0xff] %vm579, %v1320
        %s1322 = sand.u32 %s240, 1
        %s1323 = scalar_lea.sflag [#allocation3], %s1322
        %s1324 = sand.u32 %s240, 1
        %s1325 = smul.addr %s1324, 8
        %s1326 = scalar_lea.vmem [#allocation2], %s1325
        // Predicated region
        $region57: #{_lambda_.1} parent=55 // pred_check
          %p1327 = pneg %p250
        $region58: #{_lambda_.1} parent=55 // pred_check_branch
          %1329 = sbr.rel (%p1327) target = $region60
        $region59: #{_lambda_.1} parent=55 // pred_region
          %s1331 = ssub.s32 128, 128
          %1332 = vsyncadd %s1323, %s1331
          %s1333 = smul.addr %s23, 128
          %s1334 = scalar_lea.hbm %s9, %s1333
          %s1336 = sshll.u32 %s1326, 4
          %s1337 = int_to_ptr.vmem [resolvable:$true] %s1336
          %1339 = dma.vmem_to_hbm [thread:$0]  %s1337, 128, %s1334, %s1323
        $region60: #{_lambda_.1} parent=55 // pred_fallthru
          _
      $region56: #{_lambda_.1} parent=5 // pred_fallthru
        _
      %p1340 = scmp.le.s32.totalorder 2, %s18
      // Predicated region
      $region61: #{_lambda_.1} parent=5 // pred_check
        %p1341 = pneg %p1340
      $region62: #{_lambda_.1} parent=5 // pred_check_branch
        %1343 = sbr.rel (%p1341) target = $region64
      $region63: #{_lambda_.1} parent=5 // pred_region
        %s1344 = ssub.s32 %s18, 2
        // Predicated region
        $region65: #{_lambda_.1} parent=63 // pred_check
          %p1345 = pneg %p256
        $region66: #{_lambda_.1} parent=63 // pred_check_branch
          %1347 = sbr.rel (%p1345) target = $region68
        $region67: #{_lambda_.1} parent=63 // pred_region
          %s1348 = sand.u32 %s241, 1
          %s1349 = scalar_lea.sflag [#allocation3], %s1348
          %s1350 = sand.u32 %s241, 1
          %s1351 = smul.addr %s1350, 8
          %s1352 = scalar_lea.vmem [#allocation2], %s1351
          %1353 = dma.done %s1349, 128
        $region68: #{_lambda_.1} parent=63 // pred_fallthru
          _
      $region64: #{_lambda_.1} parent=5 // pred_fallthru
        _
    $region6: #{_lambda_.1} parent=1 // loop_footer
      %s22 = sadd.s32 1, %s18
    $region7: #{_lambda_.1} parent=1 // loop_footer_branch
      %17 = sbr.rel target = $region3
    $region8: #{_lambda_.1} parent=1 // loop_exit
      _
    %1354 = vsyncpa [#allocation3], 1
    %s1355 = scalar_lea.sflag [#allocation3], 1
    %1356 = vsyncpa %s1355, 1

</llo_original>
